<compile_context>
chip_gen: v6e
topology: v6e:2x2x1
jax: 0.10.0
libtpu: 0.0.40
codegen_flags: <defaults>
</compile_context>

<pallas_src>
import jax
import jax.numpy as jnp
from jax.experimental import pallas as pl
from jax.experimental.pallas import tpu as pltpu


# --------------------------------------------------------------------------
# Fused kernel factory: three_nn + three_interpolate + SharedMLP
# --------------------------------------------------------------------------
def _make_fp_kernel(couts, has_skip):
    num_layers = len(couts)
    n_fixed = 4 if has_skip else 3
    n_w = num_layers + (1 if has_skip else 0)     # first-layer weight split when skip
    boffs = []
    off = 0
    for c in couts:
        boffs.append(off)
        off += c

    def kernel(*refs):
        unk_ref = refs[0]                              # (1, 3, TN)  query xyz (lane-dense)
        kn_ref = refs[1]                               # (1, m, 3)   known xyz
        kf_ref = refs[2]                               # (1, C2, m)  known feats (bf16)
        skip_ref = refs[3] if has_skip else None       # (1, C1, TN) skip feats (bf16)
        w_refs = refs[n_fixed:n_fixed + n_w]           # folded bf16 conv weights
        b_all_ref = refs[n_fixed + n_w]                # (sum(couts), 1) f32 biases
        out_ref = refs[n_fixed + n_w + 1]              # (1, Cout, TN)

        u = unk_ref[0].astype(jnp.float32)             # (3, TN)
        k = kn_ref[0].astype(jnp.float32)              # (m, 3)
        m = k.shape[0]
        tn = u.shape[1]

        # ---- three_nn: per-coordinate squared distances (VPU only) ----------
        d2 = ((k[:, 0:1] - u[0:1, :]) ** 2
              + (k[:, 1:2] - u[1:2, :]) ** 2
              + (k[:, 2:3] - u[2:3, :]) ** 2)          # (m, TN)

        # (m, 1) iota broadcast in the comparisons -> no (m, TN) int32 live array.
        row = jax.lax.broadcasted_iota(jnp.int32, (m, 1), 0)
        BIG = jnp.float32(1e30)
        W = jnp.zeros((m, tn), jnp.float32)            # weights, already transposed
        norm = jnp.zeros((1, tn), jnp.float32)
        for nb in range(3):                            # 3 nearest neighbours
            # reductions run over the sublane (m) axis -> cheap on the VPU
            minv = jnp.min(d2, axis=0, keepdims=True)                       # (1, TN)
            amin = jnp.min(jnp.where(d2 <= minv, row, m), axis=0,
                           keepdims=True)                                   # row-min tie-break
            onehot = row == amin                                            # (m, TN)
            w = 1.0 / (jnp.sqrt(minv) + 1e-8)                               # dist_recip
            W = jnp.where(onehot, w, W)
            norm = norm + w
            if nb < 2:                                  # last refill is dead work
                d2 = jnp.where(onehot, BIG, d2)

        # ---- three_interpolate: one bf16 MXU matmul (f32 accumulation) ------
        interp = jnp.dot(kf_ref[0], W.astype(jnp.bfloat16),
                         preferred_element_type=jnp.float32)                # (C2, TN) f32
        interp = interp * (1.0 / norm)                 # normalize after the matmul

        b_all = b_all_ref[...]                         # (sum couts, 1) f32

        # ---- SharedMLP: concat fused into the split first-layer weight ------
        # TODO(synk): when C1+C2 is well below the MXU contraction depth a single
        # K=C1+C2 dot (in-VMEM concat) would fill the systolic array better.
        if has_skip:
            y = (jnp.dot(w_refs[0][...], interp.astype(jnp.bfloat16),
                         preferred_element_type=jnp.float32)
                 + jnp.dot(w_refs[1][...], skip_ref[0],
                           preferred_element_type=jnp.float32))
            wi = 2
        else:
            y = jnp.dot(w_refs[0][...], interp.astype(jnp.bfloat16),
                        preferred_element_type=jnp.float32)
            wi = 1
        y = jnp.maximum(y + b_all[boffs[0]:boffs[0] + couts[0], :], 0.0)

        for li in range(1, num_layers):                # remaining layers, unrolled
            wl = w_refs[wi + li - 1][...]
            bl = b_all[boffs[li]:boffs[li] + couts[li], :]
            y = jnp.dot(wl, y.astype(jnp.bfloat16),
                        preferred_element_type=jnp.float32)
            y = jnp.maximum(y + bl, 0.0)               # f32 epilogue (v5e-safe)

        out_ref[0] = y.astype(out_ref.dtype)

    return kernel


# --------------------------------------------------------------------------
# Per-generation tiling / VMEM configuration
# --------------------------------------------------------------------------
def _vmem_capacity_bytes():
    try:
        return int(pltpu.get_tpu_info().vmem_capacity_bytes)
    except Exception:
        return 64 * 1024 * 1024        # conservative fallback (v7x-sized)


def _auto_config(m):
    cap = _vmem_capacity_bytes()
    if cap >= 100 * 1024 * 1024:       # v5e / v6e: 128 MiB physical VMEM
        tile_target = 1024
        vmem_limit = 96 * 1024 * 1024
    else:                              # v7x: 64 MiB per TensorCore -> keep headroom
        tile_target = 512
        vmem_limit = 48 * 1024 * 1024
    vmem_limit = min(vmem_limit, (cap * 3) // 4)
    # Keep the handful of live (m, TN) f32 temporaries (d2, W, masks) well inside
    # the scoped limit until an m-chunked path exists.
    while tile_target > 128 and 4 * 4 * m * tile_target > vmem_limit // 2:
        tile_target //= 2
    return tile_target, vmem_limit


def _pick_tile_n(n, target):
    """Largest lane tile <= target that is a multiple of 128 and divides n
    (falls back to the full axis, which is always a legal block)."""
    if n <= target:
        return n
    t = (target // 128) * 128
    while t >= 128:
        if n % t == 0:
            return t
        t -= 128
    return n


# --------------------------------------------------------------------------
# PointnetFPModule forward
# --------------------------------------------------------------------------
def pointnet_fp_forward(unknown, known, unknow_feats, known_feats, layers,
                        *, tile_n=None, out_dtype=jnp.float32):
    """layers = [(conv_weight (Cout,Cin), bn_scale (Cout,1), bn_bias (Cout,1)), ...]
    with BatchNorm already folded (eval mode)."""
    B, n, _ = unknown.shape
    num_layers = len(layers)
    assert num_layers >= 1

    if known is None:
        # TODO(synk): `known is None` expand path kept in plain JAX (requires
        # known_feats last dim == 1, PyTorch .expand semantics); not exercised here.
        feats = jnp.broadcast_to(known_feats, known_feats.shape[:2] + (n,))
        if unknow_feats is not None:
            feats = jnp.concatenate([feats, unknow_feats], axis=1)
        for (w, s, b) in layers:
            feats = jnp.maximum(
                jnp.einsum('oc,bcn->bon', w, feats) * s[None] + b[None], 0.0)
        return feats.astype(out_dtype)

    m = known.shape[1]
    C2 = known_feats.shape[1]
    has_skip = unknow_feats is not None
    C1 = unknow_feats.shape[1] if has_skip else 0
    couts = tuple(int(w.shape[0]) for (w, _, _) in layers)
    Cout = couts[-1]
    assert layers[0][0].shape[1] == C2 + C1
    assert m >= 3

    tile_target, vmem_limit = _auto_config(m)
    if tile_n is not None:
        tile_target = tile_n
    TN = _pick_tile_n(n, tile_target)
    grid = (B, n // TN)

    unknown_t = jnp.transpose(unknown, (0, 2, 1))       # (B, 3, n): lane-dense coords
    known_feats_bf = known_feats.astype(jnp.bfloat16)   # halves DMA, bf16 MXU operand
    skip_bf = unknow_feats.astype(jnp.bfloat16) if has_skip else None

    # Fold BN scale into the conv weights (bf16 MXU operands); keep biases in f32
    # and pack them into a single resident array (fewer tiny VMEM windows / DMAs).
    folded_w = [(w * s).astype(jnp.bfloat16) for (w, s, _) in layers]
    b_all = jnp.concatenate([b.astype(jnp.float32) for (_, _, b) in layers], axis=0)

    w_params = []
    if has_skip:                                        # concat folded into w0 split
        w_params.append(folded_w[0][:, :C2])
        w_params.append(folded_w[0][:, C2:])
    else:
        w_params.append(folded_w[0])
    w_params.extend(folded_w[1:])

    in_arrays = [unknown_t, known, known_feats_bf]
    in_specs = [
        pl.BlockSpec((1, 3, TN), lambda b, t: (b, 0, t)),
        pl.BlockSpec((1, m, 3), lambda b, t: (b, 0, 0)),
        pl.BlockSpec((1, C2, m), lambda b, t: (b, 0, 0)),
    ]
    if has_skip:
        in_arrays.append(skip_bf)
        in_specs.append(pl.BlockSpec((1, C1, TN), lambda b, t: (b, 0, t)))
    for p in w_params + [b_all]:                        # all params 2-D, resident
        in_arrays.append(p)
        in_specs.append(pl.BlockSpec(p.shape, lambda b, t: (0, 0)))

    out_spec = pl.BlockSpec((1, Cout, TN), lambda b, t: (b, 0, t))

    # Advisory cost estimate so XLA schedules/overlaps the custom call well.
    flops = 8 * m * n + 15 * m * n + 2 * C2 * m * n
    cin = C2 + C1
    for co in couts:
        flops += 2 * co * cin * n + 2 * co * n
        cin = co
    flops *= B
    transcendentals = B * 6 * n
    bytes_accessed = (B * (4 * 3 * n + 4 * 3 * m + 2 * C2 * m + 2 * C1 * n
                           + jnp.dtype(out_dtype).itemsize * Cout * n)
                      + sum(int(p.size) * 2 for p in w_params)
                      + int(b_all.size) * 4)

    kernel = _make_fp_kernel(couts, has_skip)
    return pl.pallas_call(
        kernel,
        out_shape=jax.ShapeDtypeStruct((B, Cout, n), out_dtype),
        grid=grid,
        in_specs=in_specs,
        out_specs=out_spec,
        compiler_params=pltpu.CompilerParams(
            # Both grid axes are embarrassingly parallel -> feeds both v7x TCs.
            dimension_semantics=("parallel", "parallel"),
            vmem_limit_bytes=int(vmem_limit)),
        cost_estimate=pl.CostEstimate(flops=int(flops),
                                      transcendentals=int(transcendentals),
                                      bytes_accessed=int(bytes_accessed)),
    )(*in_arrays)


# --------------------------------------------------------------------------
# Deterministic parameter construction (SharedMLP: Conv2d(1x1)+BN2d+ReLU stack)
# --------------------------------------------------------------------------
def make_shared_mlp_params(key, mlp):
    layers = []
    for i in range(len(mlp) - 1):
        cin, cout = mlp[i], mlp[i + 1]
        key, k_w, k_g, k_b = jax.random.split(key, 4)
        w = 0.1 * jax.random.normal(k_w, (cout, cin), jnp.float32)   # Conv2d 1x1 weight
        gamma = 1.0 + 0.05 * jax.random.normal(k_g, (cout,), jnp.float32)
        beta = 0.01 * jax.random.normal(k_b, (cout,), jnp.float32)
        run_mean = jnp.zeros((cout,), jnp.float32)
        run_var = jnp.ones((cout,), jnp.float32)
        eps = 1e-5
        scale = gamma / jnp.sqrt(run_var + eps)                      # fold BN (eval mode)
        bias = beta - run_mean * scale
        layers.append((w, scale.reshape(cout, 1), bias.reshape(cout, 1)))
    return layers


# --------------------------------------------------------------------------
# Pure-JAX reference for validation (f32, unfolded scale/bias)
# --------------------------------------------------------------------------
def ref_forward(unknown, known, unknow_feats, known_feats, layers):
    d2 = jnp.sum((unknown[:, :, None, :] - known[:, None, :, :]) ** 2, axis=-1)
    dist = jnp.sqrt(jnp.maximum(d2, 0.0))                            # (B, n, m)
    neg_top, idx = jax.lax.top_k(-dist, 3)                           # 3 nearest
    top_dist = -neg_top
    dr = 1.0 / (top_dist + 1e-8)
    wgt = dr / jnp.sum(dr, axis=2, keepdims=True)                    # (B, n, 3)
    gathered = jnp.take_along_axis(known_feats[:, :, None, :],
                                   idx[:, None, :, :], axis=3)       # (B, C2, n, 3)
    interp = jnp.sum(gathered * wgt[:, None, :, :], axis=-1)         # (B, C2, n)
    feats = jnp.concatenate([interp, unknow_feats], axis=1)
    for (w, scale, bias) in layers:
        feats = jnp.einsum('oc,bcn->bon', w, feats) * scale[None] + bias[None]
        feats = jnp.maximum(feats, 0.0)
    return feats


if __name__ == "__main__":
    def run_case(key, B, n, m, C1, C2, mlp, tile_n=None):
        k_u, k_k, k_uf, k_kf, k_p = jax.random.split(key, 5)
        unknown = jax.random.normal(k_u, (B, n, 3), jnp.float32)
        known = jax.random.normal(k_k, (B, m, 3), jnp.float32)
        unknow_feats = jax.random.normal(k_uf, (B, C1, n), jnp.float32)
        known_feats = jax.random.normal(k_kf, (B, C2, m), jnp.float32)
        layers = make_shared_mlp_params(k_p, mlp)

        out = pointnet_fp_forward(unknown, known, unknow_feats, known_feats,
                                  layers, tile_n=tile_n)
        out = jax.block_until_ready(out)
        ref = ref_forward(unknown, known, unknow_feats, known_feats, layers)
        assert out.shape == (B, mlp[-1], n), out.shape
        err = float(jnp.max(jnp.abs(out - ref)))
        # bf16 MXU operands (interp gather + MLP) -> looser than the old f32 check.
        assert jnp.allclose(out, ref, atol=5e-2, rtol=5e-2), err

    key = jax.random.PRNGKey(0)
    k1, k2 = jax.random.split(key)
    # Small demo shapes (single n-tile, blocks equal full dims).
    run_case(k1, B=2, n=16, m=8, C1=4, C2=6, mlp=[10, 32, 16])
    # Larger case exercising the (B, n // TN) tiled / pipelined path.
    run_case(k2, B=2, n=256, m=64, C1=4, C2=6, mlp=[10, 32, 16], tile_n=128)

    print("KERNEL_OK")
</pallas_src>

<mosaic_0001>
module attributes {stable_mosaic.version = 11 : i64} {
  func.func @kernel(%arg0: i32, %arg1: i32, %arg2: memref<1x3x16xf32, #tpu.memory_space<vmem>>, %arg3: memref<1x8x3xf32, #tpu.memory_space<vmem>>, %arg4: memref<1x6x8xbf16, #tpu.memory_space<vmem>>, %arg5: memref<1x4x16xbf16, #tpu.memory_space<vmem>>, %arg6: memref<32x6xbf16, #tpu.memory_space<vmem>>, %arg7: memref<32x4xbf16, #tpu.memory_space<vmem>>, %arg8: memref<16x32xbf16, #tpu.memory_space<vmem>>, %arg9: memref<48x1xf32, #tpu.memory_space<vmem>>, %arg10: memref<1x16x16xf32, #tpu.memory_space<vmem>>) attributes {dimension_semantics = [#tpu.dimension_semantics<parallel>, #tpu.dimension_semantics<parallel>], iteration_bounds = array<i64: 2, 1>, scalar_prefetch = 0 : i64, scratch_operands = 0 : i64, tpu.core_type = #tpu.core_type<tc>, window_params = [{transform_indices = @transform_0, window_bounds = array<i64: 1, 3, 16>}, {transform_indices = @transform_1, window_bounds = array<i64: 1, 8, 3>}, {transform_indices = @transform_2, window_bounds = array<i64: 1, 6, 8>}, {transform_indices = @transform_3, window_bounds = array<i64: 1, 4, 16>}, {pipeline_mode = #tpu.pipeline_mode<synchronous>, transform_indices = @transform_4, window_bounds = array<i64: 32, 6>}, {pipeline_mode = #tpu.pipeline_mode<synchronous>, transform_indices = @transform_5, window_bounds = array<i64: 32, 4>}, {pipeline_mode = #tpu.pipeline_mode<synchronous>, transform_indices = @transform_6, window_bounds = array<i64: 16, 32>}, {pipeline_mode = #tpu.pipeline_mode<synchronous>, transform_indices = @transform_7, window_bounds = array<i64: 48, 1>}, {transform_indices = @transform_8, window_bounds = array<i64: 1, 16, 16>}]} {
    %c0 = arith.constant 0 : index
    %c0_0 = arith.constant 0 : index
    %c0_1 = arith.constant 0 : index
    %0 = vector.load %arg2[%c0, %c0_0, %c0_1] : memref<1x3x16xf32, #tpu.memory_space<vmem>>, vector<1x3x16xf32>
    %1 = vector.shape_cast %0 : vector<1x3x16xf32> to vector<3x16xf32>
    %c0_2 = arith.constant 0 : index
    %c0_3 = arith.constant 0 : index
    %c0_4 = arith.constant 0 : index
    %2 = vector.load %arg3[%c0_2, %c0_3, %c0_4] : memref<1x8x3xf32, #tpu.memory_space<vmem>>, vector<1x8x3xf32>
    %3 = vector.shape_cast %2 : vector<1x8x3xf32> to vector<8x3xf32>
    %4 = vector.extract_strided_slice %3 {offsets = [0, 0], sizes = [8, 1], strides = [1, 1]} : vector<8x3xf32> to vector<8x1xf32>
    %5 = vector.extract_strided_slice %1 {offsets = [0, 0], sizes = [1, 16], strides = [1, 1]} : vector<3x16xf32> to vector<1x16xf32>
    %6 = vector.broadcast %4 : vector<8x1xf32> to vector<8x16xf32>
    %7 = vector.broadcast %5 : vector<1x16xf32> to vector<8x16xf32>
    %8 = arith.subf %6, %7 : vector<8x16xf32>
    %9 = arith.mulf %8, %8 : vector<8x16xf32>
    %10 = vector.extract_strided_slice %3 {offsets = [0, 1], sizes = [8, 1], strides = [1, 1]} : vector<8x3xf32> to vector<8x1xf32>
    %11 = vector.extract_strided_slice %1 {offsets = [1, 0], sizes = [1, 16], strides = [1, 1]} : vector<3x16xf32> to vector<1x16xf32>
    %12 = vector.broadcast %10 : vector<8x1xf32> to vector<8x16xf32>
    %13 = vector.broadcast %11 : vector<1x16xf32> to vector<8x16xf32>
    %14 = arith.subf %12, %13 : vector<8x16xf32>
    %15 = arith.mulf %14, %14 : vector<8x16xf32>
    %16 = arith.addf %9, %15 : vector<8x16xf32>
    %17 = vector.extract_strided_slice %3 {offsets = [0, 2], sizes = [8, 1], strides = [1, 1]} : vector<8x3xf32> to vector<8x1xf32>
    %18 = vector.extract_strided_slice %1 {offsets = [2, 0], sizes = [1, 16], strides = [1, 1]} : vector<3x16xf32> to vector<1x16xf32>
    %19 = vector.broadcast %17 : vector<8x1xf32> to vector<8x16xf32>
    %20 = vector.broadcast %18 : vector<1x16xf32> to vector<8x16xf32>
    %21 = arith.subf %19, %20 : vector<8x16xf32>
    %22 = arith.mulf %21, %21 : vector<8x16xf32>
    %23 = arith.addf %16, %22 : vector<8x16xf32>
    %24 = tpu.iota {dimensions = array<i32: 0>} : vector<8x1xi32>
    %cst = arith.constant 0.000000e+00 : f32
    %25 = vector.broadcast %cst : f32 to vector<8x16xf32>
    %cst_5 = arith.constant 0.000000e+00 : f32
    %26 = vector.broadcast %cst_5 : f32 to vector<1x16xf32>
    %cst_6 = arith.constant dense<0x7F800000> : vector<16xf32>
    %27 = vector.multi_reduction <minimumf>, %23, %cst_6 [0] : vector<8x16xf32> to vector<16xf32>
    %28 = vector.shape_cast %27 : vector<16xf32> to vector<1x16xf32>
    %29 = vector.broadcast %28 : vector<1x16xf32> to vector<8x16xf32>
    %30 = arith.cmpf ole, %23, %29 : vector<8x16xf32>
    %c8_i32 = arith.constant 8 : i32
    %31 = vector.shape_cast %24 : vector<8x1xi32> to vector<8x1xi32>
    %32 = vector.broadcast %31 : vector<8x1xi32> to vector<8x16xi32>
    %33 = vector.broadcast %c8_i32 : i32 to vector<8x16xi32>
    %34 = arith.select %30, %32, %33 : vector<8x16xi1>, vector<8x16xi32>
    %cst_7 = arith.constant dense<2147483647> : vector<16xi32>
    %35 = vector.multi_reduction <minsi>, %34, %cst_7 [0] : vector<8x16xi32> to vector<16xi32>
    %36 = vector.shape_cast %35 : vector<16xi32> to vector<1x16xi32>
    %37 = vector.broadcast %24 : vector<8x1xi32> to vector<8x16xi32>
    %38 = vector.broadcast %36 : vector<1x16xi32> to vector<8x16xi32>
    %39 = arith.cmpi eq, %37, %38 : vector<8x16xi32>
    %40 = math.sqrt %28 : vector<1x16xf32>
    %cst_8 = arith.constant 9.99999993E-9 : f32
    %41 = vector.broadcast %cst_8 : f32 to vector<1x16xf32>
    %42 = arith.addf %40, %41 : vector<1x16xf32>
    %cst_9 = arith.constant 1.000000e+00 : f32
    %43 = vector.broadcast %cst_9 : f32 to vector<1x16xf32>
    %44 = arith.divf %43, %42 : vector<1x16xf32>
    %45 = vector.shape_cast %44 : vector<1x16xf32> to vector<1x16xf32>
    %46 = vector.broadcast %45 : vector<1x16xf32> to vector<8x16xf32>
    %47 = arith.select %39, %46, %25 : vector<8x16xi1>, vector<8x16xf32>
    %48 = arith.addf %26, %44 : vector<1x16xf32>
    %cst_10 = arith.constant 1.000000e+30 : f32
    %49 = vector.broadcast %cst_10 : f32 to vector<8x16xf32>
    %50 = arith.select %39, %49, %23 : vector<8x16xi1>, vector<8x16xf32>
    %cst_11 = arith.constant dense<0x7F800000> : vector<16xf32>
    %51 = vector.multi_reduction <minimumf>, %50, %cst_11 [0] : vector<8x16xf32> to vector<16xf32>
    %52 = vector.shape_cast %51 : vector<16xf32> to vector<1x16xf32>
    %53 = vector.broadcast %52 : vector<1x16xf32> to vector<8x16xf32>
    %54 = arith.cmpf ole, %50, %53 : vector<8x16xf32>
    %c8_i32_12 = arith.constant 8 : i32
    %55 = vector.shape_cast %24 : vector<8x1xi32> to vector<8x1xi32>
    %56 = vector.broadcast %55 : vector<8x1xi32> to vector<8x16xi32>
    %57 = vector.broadcast %c8_i32_12 : i32 to vector<8x16xi32>
    %58 = arith.select %54, %56, %57 : vector<8x16xi1>, vector<8x16xi32>
    %cst_13 = arith.constant dense<2147483647> : vector<16xi32>
    %59 = vector.multi_reduction <minsi>, %58, %cst_13 [0] : vector<8x16xi32> to vector<16xi32>
    %60 = vector.shape_cast %59 : vector<16xi32> to vector<1x16xi32>
    %61 = vector.broadcast %24 : vector<8x1xi32> to vector<8x16xi32>
    %62 = vector.broadcast %60 : vector<1x16xi32> to vector<8x16xi32>
    %63 = arith.cmpi eq, %61, %62 : vector<8x16xi32>
    %64 = math.sqrt %52 : vector<1x16xf32>
    %cst_14 = arith.constant 9.99999993E-9 : f32
    %65 = vector.broadcast %cst_14 : f32 to vector<1x16xf32>
    %66 = arith.addf %64, %65 : vector<1x16xf32>
    %cst_15 = arith.constant 1.000000e+00 : f32
    %67 = vector.broadcast %cst_15 : f32 to vector<1x16xf32>
    %68 = arith.divf %67, %66 : vector<1x16xf32>
    %69 = vector.shape_cast %68 : vector<1x16xf32> to vector<1x16xf32>
    %70 = vector.broadcast %69 : vector<1x16xf32> to vector<8x16xf32>
    %71 = arith.select %63, %70, %47 : vector<8x16xi1>, vector<8x16xf32>
    %72 = arith.addf %48, %68 : vector<1x16xf32>
    %cst_16 = arith.constant 1.000000e+30 : f32
    %73 = vector.broadcast %cst_16 : f32 to vector<8x16xf32>
    %74 = arith.select %63, %73, %50 : vector<8x16xi1>, vector<8x16xf32>
    %cst_17 = arith.constant dense<0x7F800000> : vector<16xf32>
    %75 = vector.multi_reduction <minimumf>, %74, %cst_17 [0] : vector<8x16xf32> to vector<16xf32>
    %76 = vector.shape_cast %75 : vector<16xf32> to vector<1x16xf32>
    %77 = vector.broadcast %76 : vector<1x16xf32> to vector<8x16xf32>
    %78 = arith.cmpf ole, %74, %77 : vector<8x16xf32>
    %c8_i32_18 = arith.constant 8 : i32
    %79 = vector.shape_cast %24 : vector<8x1xi32> to vector<8x1xi32>
    %80 = vector.broadcast %79 : vector<8x1xi32> to vector<8x16xi32>
    %81 = vector.broadcast %c8_i32_18 : i32 to vector<8x16xi32>
    %82 = arith.select %78, %80, %81 : vector<8x16xi1>, vector<8x16xi32>
    %cst_19 = arith.constant dense<2147483647> : vector<16xi32>
    %83 = vector.multi_reduction <minsi>, %82, %cst_19 [0] : vector<8x16xi32> to vector<16xi32>
    %84 = vector.shape_cast %83 : vector<16xi32> to vector<1x16xi32>
    %85 = vector.broadcast %24 : vector<8x1xi32> to vector<8x16xi32>
    %86 = vector.broadcast %84 : vector<1x16xi32> to vector<8x16xi32>
    %87 = arith.cmpi eq, %85, %86 : vector<8x16xi32>
    %88 = math.sqrt %76 : vector<1x16xf32>
    %cst_20 = arith.constant 9.99999993E-9 : f32
    %89 = vector.broadcast %cst_20 : f32 to vector<1x16xf32>
    %90 = arith.addf %88, %89 : vector<1x16xf32>
    %cst_21 = arith.constant 1.000000e+00 : f32
    %91 = vector.broadcast %cst_21 : f32 to vector<1x16xf32>
    %92 = arith.divf %91, %90 : vector<1x16xf32>
    %93 = vector.shape_cast %92 : vector<1x16xf32> to vector<1x16xf32>
    %94 = vector.broadcast %93 : vector<1x16xf32> to vector<8x16xf32>
    %95 = arith.select %87, %94, %71 : vector<8x16xi1>, vector<8x16xf32>
    %96 = arith.addf %72, %92 : vector<1x16xf32>
    %c0_22 = arith.constant 0 : index
    %c0_23 = arith.constant 0 : index
    %c0_24 = arith.constant 0 : index
    %97 = vector.load %arg4[%c0_22, %c0_23, %c0_24] : memref<1x6x8xbf16, #tpu.memory_space<vmem>>, vector<1x6x8xbf16>
    %98 = vector.shape_cast %97 : vector<1x6x8xbf16> to vector<6x8xbf16>
    %99 = arith.truncf %95 : vector<8x16xf32> to vector<8x16xbf16>
    %cst_25 = arith.constant dense<0.000000e+00> : vector<6x16xf32>
    %100 = tpu.matmul %98, %99, %cst_25 {dimension_numbers = #tpu.dot_dimension_numbers<[1], [0], [0], [1], [0, 0, 1, 1], [], []>} : vector<6x8xbf16>, vector<8x16xbf16>, vector<6x16xf32> -> vector<6x16xf32>
    %cst_26 = arith.constant 1.000000e+00 : f32
    %101 = vector.broadcast %cst_26 : f32 to vector<1x16xf32>
    %102 = arith.divf %101, %96 : vector<1x16xf32>
    %103 = vector.broadcast %102 : vector<1x16xf32> to vector<6x16xf32>
    %104 = arith.mulf %100, %103 : vector<6x16xf32>
    %c0_27 = arith.constant 0 : index
    %c0_28 = arith.constant 0 : index
    %105 = vector.load %arg9[%c0_27, %c0_28] : memref<48x1xf32, #tpu.memory_space<vmem>>, vector<48x1xf32>
    %c0_29 = arith.constant 0 : index
    %c0_30 = arith.constant 0 : index
    %106 = vector.load %arg6[%c0_29, %c0_30] : memref<32x6xbf16, #tpu.memory_space<vmem>>, vector<32x6xbf16>
    %107 = arith.truncf %104 : vector<6x16xf32> to vector<6x16xbf16>
    %cst_31 = arith.constant dense<0.000000e+00> : vector<32x16xf32>
    %108 = tpu.matmul %106, %107, %cst_31 {dimension_numbers = #tpu.dot_dimension_numbers<[1], [0], [0], [1], [0, 0, 1, 1], [], []>} : vector<32x6xbf16>, vector<6x16xbf16>, vector<32x16xf32> -> vector<32x16xf32>
    %c0_32 = arith.constant 0 : index
    %c0_33 = arith.constant 0 : index
    %109 = vector.load %arg7[%c0_32, %c0_33] : memref<32x4xbf16, #tpu.memory_space<vmem>>, vector<32x4xbf16>
    %c0_34 = arith.constant 0 : index
    %c0_35 = arith.constant 0 : index
    %c0_36 = arith.constant 0 : index
    %110 = vector.load %arg5[%c0_34, %c0_35, %c0_36] : memref<1x4x16xbf16, #tpu.memory_space<vmem>>, vector<1x4x16xbf16>
    %111 = vector.shape_cast %110 : vector<1x4x16xbf16> to vector<4x16xbf16>
    %cst_37 = arith.constant dense<0.000000e+00> : vector<32x16xf32>
    %112 = tpu.matmul %109, %111, %cst_37 {dimension_numbers = #tpu.dot_dimension_numbers<[1], [0], [0], [1], [0, 0, 1, 1], [], []>} : vector<32x4xbf16>, vector<4x16xbf16>, vector<32x16xf32> -> vector<32x16xf32>
    %113 = arith.addf %108, %112 : vector<32x16xf32>
    %114 = vector.extract_strided_slice %105 {offsets = [0, 0], sizes = [32, 1], strides = [1, 1]} : vector<48x1xf32> to vector<32x1xf32>
    %115 = vector.broadcast %114 : vector<32x1xf32> to vector<32x16xf32>
    %116 = arith.addf %113, %115 : vector<32x16xf32>
    %cst_38 = arith.constant 0.000000e+00 : f32
    %117 = vector.broadcast %cst_38 : f32 to vector<32x16xf32>
    %118 = arith.maximumf %116, %117 : vector<32x16xf32>
    %c0_39 = arith.constant 0 : index
    %c0_40 = arith.constant 0 : index
    %119 = vector.load %arg8[%c0_39, %c0_40] : memref<16x32xbf16, #tpu.memory_space<vmem>>, vector<16x32xbf16>
    %120 = vector.extract_strided_slice %105 {offsets = [32, 0], sizes = [16, 1], strides = [1, 1]} : vector<48x1xf32> to vector<16x1xf32>
    %121 = arith.truncf %118 : vector<32x16xf32> to vector<32x16xbf16>
    %cst_41 = arith.constant dense<0.000000e+00> : vector<16x16xf32>
    %122 = tpu.matmul %119, %121, %cst_41 {dimension_numbers = #tpu.dot_dimension_numbers<[1], [0], [0], [1], [0, 0, 1, 1], [], []>} : vector<16x32xbf16>, vector<32x16xbf16>, vector<16x16xf32> -> vector<16x16xf32>
    %123 = vector.broadcast %120 : vector<16x1xf32> to vector<16x16xf32>
    %124 = arith.addf %122, %123 : vector<16x16xf32>
    %cst_42 = arith.constant 0.000000e+00 : f32
    %125 = vector.broadcast %cst_42 : f32 to vector<16x16xf32>
    %126 = arith.maximumf %124, %125 : vector<16x16xf32>
    %c0_43 = arith.constant 0 : index
    %c0_44 = arith.constant 0 : index
    %c0_45 = arith.constant 0 : index
    %127 = vector.load %arg10[%c0_43, %c0_44, %c0_45] : memref<1x16x16xf32, #tpu.memory_space<vmem>>, vector<1x16x16xf32>
    %128 = vector.shape_cast %127 : vector<1x16x16xf32> to vector<16x16xf32>
    %129 = vector.shape_cast %126 : vector<16x16xf32> to vector<1x16x16xf32>
    tpu.vector_store %arg10[%c0_43, %c0_44, %c0_45], %129 {strides = array<i32>} : memref<1x16x16xf32, #tpu.memory_space<vmem>>, vector<1x16x16xf32>,
    return
  }
  func.func @transform_0(%arg0: i32, %arg1: i32) -> (i32, i32, i32) {
    %c0_i32 = arith.constant 0 : i32
    %c0_i32_0 = arith.constant 0 : i32
    return %arg0, %c0_i32, %arg1 : i32, i32, i32
  }
  func.func @transform_1(%arg0: i32, %arg1: i32) -> (i32, i32, i32) {
    %c0_i32 = arith.constant 0 : i32
    %c0_i32_0 = arith.constant 0 : i32
    %c0_i32_1 = arith.constant 0 : i32
    return %arg0, %c0_i32, %c0_i32_0 : i32, i32, i32
  }
  func.func @transform_2(%arg0: i32, %arg1: i32) -> (i32, i32, i32) {
    %c0_i32 = arith.constant 0 : i32
    %c0_i32_0 = arith.constant 0 : i32
    %c0_i32_1 = arith.constant 0 : i32
    return %arg0, %c0_i32, %c0_i32_0 : i32, i32, i32
  }
  func.func @transform_3(%arg0: i32, %arg1: i32) -> (i32, i32, i32) {
    %c0_i32 = arith.constant 0 : i32
    %c0_i32_0 = arith.constant 0 : i32
    return %arg0, %c0_i32, %arg1 : i32, i32, i32
  }
  func.func @transform_4(%arg0: i32, %arg1: i32) -> (i32, i32) {
    %c0_i32 = arith.constant 0 : i32
    %c0_i32_0 = arith.constant 0 : i32
    %c0_i32_1 = arith.constant 0 : i32
    return %c0_i32, %c0_i32_0 : i32, i32
  }
  func.func @transform_5(%arg0: i32, %arg1: i32) -> (i32, i32) {
    %c0_i32 = arith.constant 0 : i32
    %c0_i32_0 = arith.constant 0 : i32
    %c0_i32_1 = arith.constant 0 : i32
    return %c0_i32, %c0_i32_0 : i32, i32
  }
  func.func @transform_6(%arg0: i32, %arg1: i32) -> (i32, i32) {
    %c0_i32 = arith.constant 0 : i32
    %c0_i32_0 = arith.constant 0 : i32
    %c0_i32_1 = arith.constant 0 : i32
    return %c0_i32, %c0_i32_0 : i32, i32
  }
  func.func @transform_7(%arg0: i32, %arg1: i32) -> (i32, i32) {
    %c0_i32 = arith.constant 0 : i32
    %c0_i32_0 = arith.constant 0 : i32
    %c0_i32_1 = arith.constant 0 : i32
    return %c0_i32, %c0_i32_0 : i32, i32
  }
  func.func @transform_8(%arg0: i32, %arg1: i32) -> (i32, i32, i32) {
    %c0_i32 = arith.constant 0 : i32
    %c0_i32_0 = arith.constant 0 : i32
    return %arg0, %c0_i32, %arg1 : i32, i32, i32
  }
}

</mosaic_0001>

<llo_original>
// kernel: tpu_custom_call.1
$region0: #{tpu_custom_call.1}
  #allocation0 [shape = 'u32[]', space=smem, size = 0x4, offset = 0x4, fixed_abs, tag = 'smem constant byte address 0x4 - core index']
  #allocation1 [shape = 'u32[144,128]{1,0:T(1,128)}', space=vmem, size = 0x12000, scoped, tag = 'internal scratch']
  %s0 = inlined_call_operand.vmem [shape: f32[2,3,16], index: 0, kind: input, shape index: {}]
  %s1 = inlined_call_operand.vmem [shape: f32[2,8,3], index: 1, kind: input, shape index: {}]
  %s2 = inlined_call_operand.vmem [shape: bf16[2,6,8], index: 2, kind: input, shape index: {}]
  %s3 = inlined_call_operand.vmem [shape: bf16[2,4,16], index: 3, kind: input, shape index: {}]
  %s4 = inlined_call_operand.vmem [shape: bf16[32,6], index: 4, kind: input, shape index: {}]
  %s5 = inlined_call_operand.vmem [shape: bf16[32,4], index: 5, kind: input, shape index: {}]
  %s6 = inlined_call_operand.vmem [shape: bf16[16,32], index: 6, kind: input, shape index: {}]
  %s7 = inlined_call_operand.vmem [shape: f32[48,1], index: 7, kind: input, shape index: {}]
  %s8 = inlined_call_operand.hbm [shape: f32[2,16,16], index: 8, kind: output, shape index: {}]
  %s9 = sld [smem:[#allocation0]]
  $region65: #{tpu_custom_call.1} parent=0
    _
  %s11 = ssub.s32 1, %s9
  %s12 = scalar_select 0, %s11, %s9
  $region1: #{tpu_custom_call.1} parent=0
    #allocation2 [shape = 'u8[16384]{0}', space=vmem, size = 0x4000, scoped, tag = 'output window, operand 0']
    #allocation3 [shape = 's32[2]{0}', space=sflag, size = 0x8, scoped, tag = 'scoped memory for tpu_custom_call.1']
    %13 = vsyncpa [#allocation3], 0
    %s14 = scalar_lea.sflag [#allocation3], 1
    %15 = vsyncpa %s14, 0
    loop: start=0, step=1, limit=4
    $region2: #{tpu_custom_call.1} parent=1 // loop_pre_header
      _
    $region3: #{tpu_custom_call.1} parent=1 // loop_header
      %s17 = sphi 0, %s21
      %p18 = scmp.ge.s32.totalorder %s17, 4
      %s24 = sphi 0, %s36
      %s25 = sphi 0, %s32
      %s26 = sphi 0, %s24
      %s27 = sphi 0, %s25
      %s28 = sphi 0, %s26
      %s29 = sphi 0, %s27
      %s41 = sphi 0, %s43
      %s44 = sphi 0, %s41
      %s45 = sphi 0, %s44
      %s61 = sphi 0, %s45
      %s67 = sphi 0, %s69
      %s70 = sphi 0, %s67
      %s71 = sphi 0, %s70
      %s87 = sphi 0, %s71
      %s93 = sphi 0, %s95
      %s96 = sphi 0, %s93
      %s97 = sphi 0, %s96
      %s113 = sphi 0, %s97
      %s121 = sphi 0, %s123
      %s124 = sphi 0, %s121
      %s125 = sphi 0, %s124
      %s141 = sphi 0, %s125
      %s145 = sphi 0, %s145
      %s147 = sphi 0, %s145
      %s148 = sphi 0, %s147
      %s162 = sphi 0, %s148
      %s166 = sphi 0, %s166
      %s168 = sphi 0, %s166
      %s169 = sphi 0, %s168
      %s183 = sphi 0, %s169
      %s187 = sphi 0, %s187
      %s189 = sphi 0, %s187
      %s190 = sphi 0, %s189
      %s204 = sphi 0, %s190
      %s208 = sphi 0, %s208
      %s210 = sphi 0, %s208
      %s211 = sphi 0, %s210
      %s225 = sphi 0, %s211
      %s233 = sphi 0, %s235
      %s236 = sphi 0, %s233
      %s237 = sphi 0, %s236
      %s253 = sphi 0, %s237
    $region4: #{tpu_custom_call.1} parent=1 // loop_header_branch
      %20 = sbr.rel (%p18) target = $region8
    $region5: #{tpu_custom_call.1} parent=1 // loop_body
      %s22 = ssub.s32 %s17, 1
      %s23 = ssub.s32 %s17, 2
      %s30 = sadd.s32 1, %s25
      %p31 = scmp.ge.s32.totalorder %s30, 1
      %s32 = scalar_select %p31, 0, %s30
      %s33 = sadd.s32 1, %s24
      %s34 = scalar_select %p31, %s33, %s24
      %p35 = scmp.ge.s32.totalorder %s34, 2
      %s36 = scalar_select %p35, 0, %s34
      %s37 = ssub.s32 %s24, %s36
      %s38 = ssub.s32 %s25, %s32
      %s39 = sor.u32 %s37, %s38
      %p40 = scmp.eq.s32.totalorder %s39, 0
      %s42 = sadd.s32 %s41, 1
      %s43 = scalar_select %p40, %s41, %s42
      %p46 = pneg %p40
      %p47 = scmp.eq.s32.totalorder %s17, 1
      %p48 = por %p46, %p47
      %p49 = scmp.ne.s32.totalorder %s41, %s44
      %p50 = scmp.eq.s32.totalorder %s17, 0
      %p51 = por %p49, %p50
      %p52 = scmp.ne.s32.totalorder %s41, %s44
      %p53 = scmp.eq.s32.totalorder %s22, 1
      %p54 = por %p52, %p53
      %p55 = scmp.ne.s32.totalorder %s44, %s45
      %p56 = scmp.eq.s32.totalorder %s22, 0
      %p57 = por %p55, %p56
      %p58 = scmp.ne.s32.totalorder %s44, %s45
      %p59 = scmp.eq.s32.totalorder %s23, 1
      %p60 = por %p58, %p59
      %p62 = scmp.ne.s32.totalorder %s45, %s61
      %p63 = scmp.eq.s32.totalorder %s23, 0
      %p64 = por %p62, %p63
      %s65 = ssub.s32 %s24, %s36
      %p66 = scmp.eq.s32.totalorder %s65, 0
      %s68 = sadd.s32 %s67, 1
      %s69 = scalar_select %p66, %s67, %s68
      %p72 = pneg %p66
      %p73 = scmp.eq.s32.totalorder %s17, 1
      %p74 = por %p72, %p73
      %p75 = scmp.ne.s32.totalorder %s67, %s70
      %p76 = scmp.eq.s32.totalorder %s17, 0
      %p77 = por %p75, %p76
      %p78 = scmp.ne.s32.totalorder %s67, %s70
      %p79 = scmp.eq.s32.totalorder %s22, 1
      %p80 = por %p78, %p79
      %p81 = scmp.ne.s32.totalorder %s70, %s71
      %p82 = scmp.eq.s32.totalorder %s22, 0
      %p83 = por %p81, %p82
      %p84 = scmp.ne.s32.totalorder %s70, %s71
      %p85 = scmp.eq.s32.totalorder %s23, 1
      %p86 = por %p84, %p85
      %p88 = scmp.ne.s32.totalorder %s71, %s87
      %p89 = scmp.eq.s32.totalorder %s23, 0
      %p90 = por %p88, %p89
      %s91 = ssub.s32 %s24, %s36
      %p92 = scmp.eq.s32.totalorder %s91, 0
      %s94 = sadd.s32 %s93, 1
      %s95 = scalar_select %p92, %s93, %s94
      %p98 = pneg %p92
      %p99 = scmp.eq.s32.totalorder %s17, 1
      %p100 = por %p98, %p99
      %p101 = scmp.ne.s32.totalorder %s93, %s96
      %p102 = scmp.eq.s32.totalorder %s17, 0
      %p103 = por %p101, %p102
      %p104 = scmp.ne.s32.totalorder %s93, %s96
      %p105 = scmp.eq.s32.totalorder %s22, 1
      %p106 = por %p104, %p105
      %p107 = scmp.ne.s32.totalorder %s96, %s97
      %p108 = scmp.eq.s32.totalorder %s22, 0
      %p109 = por %p107, %p108
      %p110 = scmp.ne.s32.totalorder %s96, %s97
      %p111 = scmp.eq.s32.totalorder %s23, 1
      %p112 = por %p110, %p111
      %p114 = scmp.ne.s32.totalorder %s97, %s113
      %p115 = scmp.eq.s32.totalorder %s23, 0
      %p116 = por %p114, %p115
      %s117 = ssub.s32 %s24, %s36
      %s118 = ssub.s32 %s25, %s32
      %s119 = sor.u32 %s117, %s118
      %p120 = scmp.eq.s32.totalorder %s119, 0
      %s122 = sadd.s32 %s121, 1
      %s123 = scalar_select %p120, %s121, %s122
      %p126 = pneg %p120
      %p127 = scmp.eq.s32.totalorder %s17, 1
      %p128 = por %p126, %p127
      %p129 = scmp.ne.s32.totalorder %s121, %s124
      %p130 = scmp.eq.s32.totalorder %s17, 0
      %p131 = por %p129, %p130
      %p132 = scmp.ne.s32.totalorder %s121, %s124
      %p133 = scmp.eq.s32.totalorder %s22, 1
      %p134 = por %p132, %p133
      %p135 = scmp.ne.s32.totalorder %s124, %s125
      %p136 = scmp.eq.s32.totalorder %s22, 0
      %p137 = por %p135, %p136
      %p138 = scmp.ne.s32.totalorder %s124, %s125
      %p139 = scmp.eq.s32.totalorder %s23, 1
      %p140 = por %p138, %p139
      %p142 = scmp.ne.s32.totalorder %s125, %s141
      %p143 = scmp.eq.s32.totalorder %s23, 0
      %p144 = por %p142, %p143
      %s146 = sadd.s32 %s145, 1
      %p149 = scmp.eq.s32.totalorder %s17, 1
      %p150 = scmp.ne.s32.totalorder %s145, %s147
      %p151 = scmp.eq.s32.totalorder %s17, 0
      %p152 = por %p150, %p151
      %p153 = scmp.ne.s32.totalorder %s145, %s147
      %p154 = scmp.eq.s32.totalorder %s22, 1
      %p155 = por %p153, %p154
      %p156 = scmp.ne.s32.totalorder %s147, %s148
      %p157 = scmp.eq.s32.totalorder %s22, 0
      %p158 = por %p156, %p157
      %p159 = scmp.ne.s32.totalorder %s147, %s148
      %p160 = scmp.eq.s32.totalorder %s23, 1
      %p161 = por %p159, %p160
      %p163 = scmp.ne.s32.totalorder %s148, %s162
      %p164 = scmp.eq.s32.totalorder %s23, 0
      %p165 = por %p163, %p164
      %s167 = sadd.s32 %s166, 1
      %p170 = scmp.eq.s32.totalorder %s17, 1
      %p171 = scmp.ne.s32.totalorder %s166, %s168
      %p172 = scmp.eq.s32.totalorder %s17, 0
      %p173 = por %p171, %p172
      %p174 = scmp.ne.s32.totalorder %s166, %s168
      %p175 = scmp.eq.s32.totalorder %s22, 1
      %p176 = por %p174, %p175
      %p177 = scmp.ne.s32.totalorder %s168, %s169
      %p178 = scmp.eq.s32.totalorder %s22, 0
      %p179 = por %p177, %p178
      %p180 = scmp.ne.s32.totalorder %s168, %s169
      %p181 = scmp.eq.s32.totalorder %s23, 1
      %p182 = por %p180, %p181
      %p184 = scmp.ne.s32.totalorder %s169, %s183
      %p185 = scmp.eq.s32.totalorder %s23, 0
      %p186 = por %p184, %p185
      %s188 = sadd.s32 %s187, 1
      %p191 = scmp.eq.s32.totalorder %s17, 1
      %p192 = scmp.ne.s32.totalorder %s187, %s189
      %p193 = scmp.eq.s32.totalorder %s17, 0
      %p194 = por %p192, %p193
      %p195 = scmp.ne.s32.totalorder %s187, %s189
      %p196 = scmp.eq.s32.totalorder %s22, 1
      %p197 = por %p195, %p196
      %p198 = scmp.ne.s32.totalorder %s189, %s190
      %p199 = scmp.eq.s32.totalorder %s22, 0
      %p200 = por %p198, %p199
      %p201 = scmp.ne.s32.totalorder %s189, %s190
      %p202 = scmp.eq.s32.totalorder %s23, 1
      %p203 = por %p201, %p202
      %p205 = scmp.ne.s32.totalorder %s190, %s204
      %p206 = scmp.eq.s32.totalorder %s23, 0
      %p207 = por %p205, %p206
      %s209 = sadd.s32 %s208, 1
      %p212 = scmp.eq.s32.totalorder %s17, 1
      %p213 = scmp.ne.s32.totalorder %s208, %s210
      %p214 = scmp.eq.s32.totalorder %s17, 0
      %p215 = por %p213, %p214
      %p216 = scmp.ne.s32.totalorder %s208, %s210
      %p217 = scmp.eq.s32.totalorder %s22, 1
      %p218 = por %p216, %p217
      %p219 = scmp.ne.s32.totalorder %s210, %s211
      %p220 = scmp.eq.s32.totalorder %s22, 0
      %p221 = por %p219, %p220
      %p222 = scmp.ne.s32.totalorder %s210, %s211
      %p223 = scmp.eq.s32.totalorder %s23, 1
      %p224 = por %p222, %p223
      %p226 = scmp.ne.s32.totalorder %s211, %s225
      %p227 = scmp.eq.s32.totalorder %s23, 0
      %p228 = por %p226, %p227
      %s229 = ssub.s32 %s24, %s36
      %s230 = ssub.s32 %s25, %s32
      %s231 = sor.u32 %s229, %s230
      %p232 = scmp.eq.s32.totalorder %s231, 0
      %s234 = sadd.s32 %s233, 1
      %s235 = scalar_select %p232, %s233, %s234
      %p238 = pneg %p232
      %p239 = scmp.eq.s32.totalorder %s17, 1
      %p240 = por %p238, %p239
      %p241 = scmp.ne.s32.totalorder %s233, %s236
      %p242 = scmp.eq.s32.totalorder %s17, 0
      %p243 = por %p241, %p242
      %p244 = scmp.ne.s32.totalorder %s233, %s236
      %p245 = scmp.eq.s32.totalorder %s22, 1
      %p246 = por %p244, %p245
      %p247 = scmp.ne.s32.totalorder %s236, %s237
      %p248 = scmp.eq.s32.totalorder %s22, 0
      %p249 = por %p247, %p248
      %p250 = scmp.ne.s32.totalorder %s236, %s237
      %p251 = scmp.eq.s32.totalorder %s23, 1
      %p252 = por %p250, %p251
      %p254 = scmp.ne.s32.totalorder %s237, %s253
      %p255 = scmp.eq.s32.totalorder %s23, 0
      %p256 = por %p254, %p255
      %p257 = scmp.le.s32.totalorder 1, %s17
      %p258 = scmp.lt.s32.totalorder %s17, 3
      %p259 = pnand %p257, %p258
      %p260 = pneg %p259
      // Predicated region
      $region9: #{tpu_custom_call.1} parent=5 // pred_check
        _
      $region10: #{tpu_custom_call.1} parent=5 // pred_check_branch
        %262 = sbr.rel (%p259) target = $region12
      $region11: #{tpu_custom_call.1} parent=5 // pred_region
        %s263 = ssub.s32 %s17, 1
        // Predicated region
        $region13: #{tpu_custom_call.1} parent=11 // pred_check
          %p264 = pneg %p158
        $region14: #{tpu_custom_call.1} parent=11 // pred_check_branch
          %266 = sbr.rel (%p264) target = $region16
        $region15: #{tpu_custom_call.1} parent=11 // pred_region
          _
        $region16: #{tpu_custom_call.1} parent=11 // pred_fallthru
          _
        // Predicated region
        $region17: #{tpu_custom_call.1} parent=11 // pred_check
          %p267 = pneg %p179
        $region18: #{tpu_custom_call.1} parent=11 // pred_check_branch
          %269 = sbr.rel (%p267) target = $region20
        $region19: #{tpu_custom_call.1} parent=11 // pred_region
          _
        $region20: #{tpu_custom_call.1} parent=11 // pred_fallthru
          _
        // Predicated region
        $region21: #{tpu_custom_call.1} parent=11 // pred_check
          %p270 = pneg %p200
        $region22: #{tpu_custom_call.1} parent=11 // pred_check_branch
          %272 = sbr.rel (%p270) target = $region24
        $region23: #{tpu_custom_call.1} parent=11 // pred_region
          _
        $region24: #{tpu_custom_call.1} parent=11 // pred_fallthru
          _
        // Predicated region
        $region25: #{tpu_custom_call.1} parent=11 // pred_check
          %p273 = pneg %p221
        $region26: #{tpu_custom_call.1} parent=11 // pred_check_branch
          %275 = sbr.rel (%p273) target = $region28
        $region27: #{tpu_custom_call.1} parent=11 // pred_region
          _
        $region28: #{tpu_custom_call.1} parent=11 // pred_fallthru
          _
      $region12: #{tpu_custom_call.1} parent=5 // pred_fallthru
        _
      %p276 = scmp.lt.s32.totalorder %s17, 2
      // Predicated region
      $region29: #{tpu_custom_call.1} parent=5 // pred_check
        %p277 = pneg %p276
      $region30: #{tpu_custom_call.1} parent=5 // pred_check_branch
        %279 = sbr.rel (%p277) target = $region32
      $region31: #{tpu_custom_call.1} parent=5 // pred_region
        // Predicated region
        $region33: #{tpu_custom_call.1} parent=31 // pred_check
          %p280 = pneg %p51
        $region34: #{tpu_custom_call.1} parent=31 // pred_check_branch
          %282 = sbr.rel (%p280) target = $region36
        $region35: #{tpu_custom_call.1} parent=31 // pred_region
          %p283 = scmp.lt.s32.totalorder %s24, 1
          %s284 = scalar_select %p283, %s24, 1
          %p285 = scmp.lt.s32.totalorder %s25, 0
          %s286 = scalar_select %p285, %s25, 0
          %s287 = sadd.s32 %s286, %s284
          %s288 = smul.addr %s287, 4
          %s289 = scalar_lea.vmem %s0, %s288
        $region36: #{tpu_custom_call.1} parent=31 // pred_fallthru
          _
        // Predicated region
        $region37: #{tpu_custom_call.1} parent=31 // pred_check
          %p290 = pneg %p77
        $region38: #{tpu_custom_call.1} parent=31 // pred_check_branch
          %292 = sbr.rel (%p290) target = $region40
        $region39: #{tpu_custom_call.1} parent=31 // pred_region
          %p293 = scmp.lt.s32.totalorder %s24, 1
          %s294 = scalar_select %p293, %s24, 1
          %s295 = smul.addr %s294, 8
          %s296 = scalar_lea.vmem %s1, %s295
        $region40: #{tpu_custom_call.1} parent=31 // pred_fallthru
          _
        // Predicated region
        $region41: #{tpu_custom_call.1} parent=31 // pred_check
          %p297 = pneg %p103
        $region42: #{tpu_custom_call.1} parent=31 // pred_check_branch
          %299 = sbr.rel (%p297) target = $region44
        $region43: #{tpu_custom_call.1} parent=31 // pred_region
          %p300 = scmp.lt.s32.totalorder %s24, 1
          %s301 = scalar_select %p300, %s24, 1
          %s302 = smul.addr %s301, 4
          %s303 = scalar_lea.vmem %s2, %s302
        $region44: #{tpu_custom_call.1} parent=31 // pred_fallthru
          _
        // Predicated region
        $region45: #{tpu_custom_call.1} parent=31 // pred_check
          %p304 = pneg %p131
        $region46: #{tpu_custom_call.1} parent=31 // pred_check_branch
          %306 = sbr.rel (%p304) target = $region48
        $region47: #{tpu_custom_call.1} parent=31 // pred_region
          %p307 = scmp.lt.s32.totalorder %s24, 1
          %s308 = scalar_select %p307, %s24, 1
          %p309 = scmp.lt.s32.totalorder %s25, 0
          %s310 = scalar_select %p309, %s25, 0
          %s311 = sadd.s32 %s310, %s308
          %s312 = smul.addr %s311, 2
          %s313 = scalar_lea.vmem %s3, %s312
        $region48: #{tpu_custom_call.1} parent=31 // pred_fallthru
          _
      $region32: #{tpu_custom_call.1} parent=5 // pred_fallthru
        _
      %p314 = scmp.le.s32.totalorder 1, %s17
      %p315 = scmp.lt.s32.totalorder %s17, 3
      %p316 = pnand %p314, %p315
      %p317 = pneg %p316
      // Predicated region
      $region49: #{tpu_custom_call.1} parent=5 // pred_check
        _
      $region50: #{tpu_custom_call.1} parent=5 // pred_check_branch
        %319 = sbr.rel (%p316) target = $region52
      $region51: #{tpu_custom_call.1} parent=5 // pred_region
        %s320 = ssub.s32 %s17, 1
        %p321 = scmp.lt.s32.totalorder %s26, 1
        %s322 = scalar_select %p321, %s26, 1
        %p323 = scmp.lt.s32.totalorder %s27, 0
        %s324 = scalar_select %p323, %s27, 0
        %s325 = sadd.s32 %s324, %s322
        %s326 = smul.addr %s325, 4
        %s327 = scalar_lea.vmem %s0, %s326
        %p328 = pneg %p57
        %p329 = pneg %p54
        %p330 = scmp.lt.s32.totalorder %s26, 1
        %s331 = scalar_select %p330, %s26, 1
        %s332 = smul.addr %s331, 8
        %s333 = scalar_lea.vmem %s1, %s332
        %p334 = pneg %p83
        %p335 = pneg %p80
        %p336 = scmp.lt.s32.totalorder %s26, 1
        %s337 = scalar_select %p336, %s26, 1
        %s338 = smul.addr %s337, 4
        %s339 = scalar_lea.vmem %s2, %s338
        %p340 = pneg %p109
        %p341 = pneg %p106
        %p342 = scmp.lt.s32.totalorder %s26, 1
        %s343 = scalar_select %p342, %s26, 1
        %p344 = scmp.lt.s32.totalorder %s27, 0
        %s345 = scalar_select %p344, %s27, 0
        %s346 = sadd.s32 %s345, %s343
        %s347 = smul.addr %s346, 2
        %s348 = scalar_lea.vmem %s3, %s347
        %p349 = pneg %p137
        %p350 = pneg %p134
        %p351 = pneg %p158
        %p352 = pneg %p155
        %p353 = pneg %p179
        %p354 = pneg %p176
        %p355 = pneg %p200
        %p356 = pneg %p197
        %p357 = pneg %p221
        %p358 = pneg %p218
        %p359 = pneg %p249
        %p360 = pneg %p246
        %s361 = sand.u32 %s236, 1
        %s362 = scalar_lea.sflag [#allocation3], %s361
        %s363 = sand.u32 %s236, 1
        %s364 = smul.addr %s363, 16
        %s365 = scalar_lea.vmem [#allocation2], %s364
        %p366 = scmp.lt.s32.totalorder %s26, 1
        %s367 = scalar_select %p366, %s26, 1
        %p368 = scmp.lt.s32.totalorder %s27, 0
        %s369 = scalar_select %p368, %s27, 0
        %s370 = sadd.s32 %s369, %s367
        %s371 = smul.addr %s370, 4
        %s372 = scalar_lea.vmem %s0, %s371
        %p373 = scmp.lt.s32.totalorder %s26, 1
        %s374 = scalar_select %p373, %s26, 1
        %s375 = smul.addr %s374, 8
        %s376 = scalar_lea.vmem %s1, %s375
        %p377 = scmp.lt.s32.totalorder %s26, 1
        %s378 = scalar_select %p377, %s26, 1
        %s379 = smul.addr %s378, 4
        %s380 = scalar_lea.vmem %s2, %s379
        %p381 = scmp.lt.s32.totalorder %s26, 1
        %s382 = scalar_select %p381, %s26, 1
        %p383 = scmp.lt.s32.totalorder %s27, 0
        %s384 = scalar_select %p383, %s27, 0
        %s385 = sadd.s32 %s384, %s382
        %s386 = smul.addr %s385, 2
        %s387 = scalar_lea.vmem %s3, %s386
        %v389 = vld [vmem:[%s372] sm:$0x7]
        %v390 = vld [vmem:[%s376] sm:$0xff]
        %392 = vset.pattern.permute.xlu0 0
        %393 = vperm.xlu0 %392, %v390
        %v394 = vpop.permute.xlu0 %393
        %v396 = vlaneseq
        %v397 = vshrl.u32 %v396, 7
        %v398 = vsub.s32 0, %v397
        %v399 = vrot.slane %v389, %v398
        %v400 = vsub.f32 %v394, %v399
        %v401 = vmul.f32 %v400, %v400
        %402 = vset.pattern.permute.xlu0 1
        %403 = vperm.xlu0 %402, %v390
        %v404 = vpop.permute.xlu0 %403
        %v406 = vlaneseq
        %v407 = vshrl.u32 %v406, 7
        %v408 = vsub.s32 1, %v407
        %v409 = vrot.slane %v389, %v408
        %v410 = vsub.f32 %v404, %v409
        %v411 = vmul.f32 %v410, %v410
        %v412 = vadd.f32 %v401, %v411
        %413 = vset.pattern.permute.xlu0 2
        %414 = vperm.xlu0 %413, %v390
        %v415 = vpop.permute.xlu0 %414
        %v417 = vlaneseq
        %v418 = vshrl.u32 %v417, 7
        %v419 = vsub.s32 2, %v418
        %v420 = vrot.slane %v389, %v419
        %v421 = vsub.f32 %v415, %v420
        %v422 = vmul.f32 %v421, %v421
        %v423 = vadd.f32 %v412, %v422
        %v424 = vlaneseq
        %v425 = vshrl.u32 %v424, 7
        %vm426 = vcmask 130048
        %v427 = vsel %vm426, %v423, inf
        %v428 = vrot.slane %v427, 4
        %v429 = vmin.f32 %v427, %v428
        %v430 = vrot.slane %v429, 2
        %v431 = vmin.f32 %v429, %v430
        %v432 = vrot.slane %v431, 1
        %v433 = vmin.f32 %v431, %v432
        %vm434 = vcmp.le.f32.partialorder %v423, %v433
        %v435 = vsel %vm434, %v425, 8
        %v436 = vsel %vm426, %v435, 2147483647
        %v437 = vrot.slane %v436, 4
        %vm438 = vcmp.lt.s32.totalorder %v436, %v437
        %v439 = vsel %vm438, %v436, %v437
        %v440 = vrot.slane %v439, 2
        %vm441 = vcmp.lt.s32.totalorder %v439, %v440
        %v442 = vsel %vm441, %v439, %v440
        %v443 = vrot.slane %v442, 1
        %vm444 = vcmp.lt.s32.totalorder %v442, %v443
        %v445 = vsel %vm444, %v442, %v443
        %vm446 = vcmp.eq.s32.totalorder %v425, %v445
        %v447 = vrsqrt.pop %v433
        %v448 = vmul.f32 %v433, %v447
        %vm449 = vcmp.eq.f32.partialorder %v433, inf
        %v450 = vsel %vm449, %v433, %v448
        %vm451 = vcmp.eq.f32.partialorder %v433, 0.0
        %v452 = vand.u32 %v433, 2147483648
        %v453 = vsel %vm451, %v452, %v450
        %v454 = vadd.f32 %v453, 1e-08
        %v455 = vrcp.pop %v454
        %v456 = vmul.f32 1.0, %v455
        %v457 = vsel %vm446, %v456, 0.0
        %v458 = vadd.f32 %v456, 0.0
        %v459 = vsel %vm446, 1e+30, %v423
        %v460 = vsel %vm426, %v459, inf
        %v461 = vrot.slane %v460, 4
        %v462 = vmin.f32 %v460, %v461
        %v463 = vrot.slane %v462, 2
        %v464 = vmin.f32 %v462, %v463
        %v465 = vrot.slane %v464, 1
        %v466 = vmin.f32 %v464, %v465
        %vm467 = vcmp.le.f32.partialorder %v459, %v466
        %v468 = vsel %vm467, %v425, 8
        %v469 = vsel %vm426, %v468, 2147483647
        %v470 = vrot.slane %v469, 4
        %vm471 = vcmp.lt.s32.totalorder %v469, %v470
        %v472 = vsel %vm471, %v469, %v470
        %v473 = vrot.slane %v472, 2
        %vm474 = vcmp.lt.s32.totalorder %v472, %v473
        %v475 = vsel %vm474, %v472, %v473
        %v476 = vrot.slane %v475, 1
        %vm477 = vcmp.lt.s32.totalorder %v475, %v476
        %v478 = vsel %vm477, %v475, %v476
        %vm479 = vcmp.eq.s32.totalorder %v425, %v478
        %v480 = vrsqrt.pop %v466
        %v481 = vmul.f32 %v466, %v480
        %vm482 = vcmp.eq.f32.partialorder %v466, inf
        %v483 = vsel %vm482, %v466, %v481
        %vm484 = vcmp.eq.f32.partialorder %v466, 0.0
        %v485 = vand.u32 %v466, 2147483648
        %v486 = vsel %vm484, %v485, %v483
        %v487 = vadd.f32 %v486, 1e-08
        %v488 = vrcp.pop %v487
        %v489 = vmul.f32 1.0, %v488
        %v490 = vsel %vm479, %v489, %v457
        %v491 = vadd.f32 %v458, %v489
        %v492 = vsel %vm479, 1e+30, %v459
        %v493 = vsel %vm426, %v492, inf
        %v494 = vrot.slane %v493, 4
        %v495 = vmin.f32 %v493, %v494
        %v496 = vrot.slane %v495, 2
        %v497 = vmin.f32 %v495, %v496
        %v498 = vrot.slane %v497, 1
        %v499 = vmin.f32 %v497, %v498
        %vm500 = vcmp.le.f32.partialorder %v492, %v499
        %v501 = vsel %vm500, %v425, 8
        %v502 = vsel %vm426, %v501, 2147483647
        %v503 = vrot.slane %v502, 4
        %vm504 = vcmp.lt.s32.totalorder %v502, %v503
        %v505 = vsel %vm504, %v502, %v503
        %v506 = vrot.slane %v505, 2
        %vm507 = vcmp.lt.s32.totalorder %v505, %v506
        %v508 = vsel %vm507, %v505, %v506
        %v509 = vrot.slane %v508, 1
        %vm510 = vcmp.lt.s32.totalorder %v508, %v509
        %v511 = vsel %vm510, %v508, %v509
        %vm512 = vcmp.eq.s32.totalorder %v425, %v511
        %v513 = vrsqrt.pop %v499
        %v514 = vmul.f32 %v499, %v513
        %vm515 = vcmp.eq.f32.partialorder %v499, inf
        %v516 = vsel %vm515, %v499, %v514
        %vm517 = vcmp.eq.f32.partialorder %v499, 0.0
        %v518 = vand.u32 %v499, 2147483648
        %v519 = vsel %vm517, %v518, %v516
        %v520 = vadd.f32 %v519, 1e-08
        %v521 = vrcp.pop %v520
        %v522 = vmul.f32 1.0, %v521
        %v523 = vsel %vm512, %v522, %v490
        %v524 = vadd.f32 %v491, %v522
        %v525 = vld [vmem:[%s380] sm:$0x7]
        %v526 = vpack.c.bf16 %v523, %v523
        %vm527 = vcmask 64512
        %v529 = vsel %vm527, %v525, 0
        %vm531 = vcmask 1043456
        %v533 = vsel %vm531, %v526, 0
        %535 = vmatprep.subr.bf16.mxu0 0
        %536 = vmatpush1.bf16.msra.mxu0 0
        %537 = vmatprep.subr.bf16.mxu0 0
        %538 = vmatpush1.bf16.msra.mxu0 0
        %539 = vmatprep.subr.bf16.mxu0 0
        %540 = vmatpush1.bf16.msra.mxu0 0
        %541 = vmatprep.subr.bf16.mxu0 0
        %542 = vmatpush1.bf16.msra.mxu0 0
        %543 = vmatprep.subr.bf16.mxu0 0
        %544 = vmatpush1.bf16.msra.mxu0 0
        %545 = vmatprep.subr.bf16.mxu0 0
        %546 = vmatpush1.bf16.msra.mxu0 0
        %547 = vmatprep.subr.bf16.mxu0 0
        %548 = vmatpush1.bf16.msra.mxu0 0
        %549 = vmatprep.subr.bf16.mxu0 0
        %550 = vmatpush1.bf16.msra.mxu0 %v533
        %551 = vmatprep.subr.bf16.mxu0 0
        %552 = vmatpush2.bf16.msra.mxu0 0
        %553 = vmatprep.subr.bf16.mxu0 0
        %554 = vmatpush2.bf16.msra.mxu0 0
        %555 = vmatprep.subr.bf16.mxu0 0
        %556 = vmatpush2.bf16.msra.mxu0 0
        %557 = vmatprep.subr.bf16.mxu0 0
        %558 = vmatpush2.bf16.msra.mxu0 0
        %559 = vmatprep.subr.bf16.mxu0 0
        %560 = vmatpush2.bf16.msra.mxu0 0
        %561 = vmatprep.subr.bf16.mxu0 0
        %562 = vmatpush2.bf16.msra.mxu0 0
        %563 = vmatprep.subr.bf16.mxu0 0
        %564 = vmatpush2.bf16.msra.mxu0 0
        %565 = vmatprep.subr.bf16.mxu0 0
        %566 = vmatpush2.bf16.msra.mxu0 0
        %567 = vmatprep.mubr.bf16.mxu0 0
        %568 = vmatmul.mubr.bf16.gmra.mxu0 %v529
        %v569 = vpop.f32.mrf.mxu0
        %v570 = vadd.f32 0.0, %v569
        %v571 = vpop.f32.mrf.mxu0
        %v572 = vpop.f32.mrf.mxu0
        %v573 = vpop.f32.mrf.mxu0
        %574 = vdwg.mxu0
        %v575 = vrcp.pop %v524
        %v576 = vmul.f32 1.0, %v575
        %v577 = vmul.f32 %v570, %v576
        %v578 = vld [vmem:[%s7] sm:$0xff]
        %v579 = vld [vmem:[%s7 + $0x8] sm:$0xff]
        %v580 = vld [vmem:[%s7 + $0x10] sm:$0xff]
        %v581 = vld [vmem:[%s7 + $0x18] sm:$0xff]
        %v582 = vld [vmem:[%s7 + $0x20] sm:$0xff]
        %v583 = vld [vmem:[%s7 + $0x28] sm:$0xff]
        %v584 = vld [vmem:[%s4] sm:$0xf]
        %v585 = vld [vmem:[%s4 + $0x4] sm:$0xf]
        %v586 = vld [vmem:[%s4 + $0x8] sm:$0xf]
        %v587 = vld [vmem:[%s4 + $0xc] sm:$0xf]
        %v588 = vpack.c.bf16 %v577, %v577
        %v589 = vld [vmem:[%s5] sm:$0xf]
        %v590 = vld [vmem:[%s5 + $0x4] sm:$0xf]
        %v591 = vld [vmem:[%s5 + $0x8] sm:$0xf]
        %v592 = vld [vmem:[%s5 + $0xc] sm:$0xf]
        %v593 = vld [vmem:[%s387] sm:$0x3]
        %v598 = vunpack.c.l.b16 %v589
        %v599 = vunpack.c.l.b16 %v590
        %v600 = vunpack.c.l.b16 %v591
        %v601 = vunpack.c.l.b16 %v592
        %v602 = vpack.c.b16 %v599, %v598
        %v603 = vpack.c.b16 %v601, %v600
        %vm604 = vcmask 31744
        %v606 = vsel %vm604, %v602, 0
        %v609 = vsel %vm604, %v603, 0
        %vm611 = vcmask 1041408
        %v613 = vsel %vm611, %v593, 0
        %615 = vmatprep.subr.bf16.mxu0 0
        %616 = vmatpush1.bf16.msra.mxu0 0
        %617 = vmatprep.subr.bf16.mxu0 0
        %618 = vmatpush1.bf16.msra.mxu0 0
        %619 = vmatprep.subr.bf16.mxu0 0
        %620 = vmatpush1.bf16.msra.mxu0 0
        %621 = vmatprep.subr.bf16.mxu0 0
        %622 = vmatpush1.bf16.msra.mxu0 0
        %623 = vmatprep.subr.bf16.mxu0 0
        %624 = vmatpush1.bf16.msra.mxu0 0
        %625 = vmatprep.subr.bf16.mxu0 0
        %626 = vmatpush1.bf16.msra.mxu0 0
        %627 = vmatprep.subr.bf16.mxu0 0
        %628 = vmatpush1.bf16.msra.mxu0 0
        %629 = vmatprep.subr.bf16.mxu0 0
        %630 = vmatpush1.bf16.msra.mxu0 %v613
        %631 = vmatprep.subr.bf16.mxu0 0
        %632 = vmatpush2.bf16.msra.mxu0 0
        %633 = vmatprep.subr.bf16.mxu0 0
        %634 = vmatpush2.bf16.msra.mxu0 0
        %635 = vmatprep.subr.bf16.mxu0 0
        %636 = vmatpush2.bf16.msra.mxu0 0
        %637 = vmatprep.subr.bf16.mxu0 0
        %638 = vmatpush2.bf16.msra.mxu0 0
        %639 = vmatprep.subr.bf16.mxu0 0
        %640 = vmatpush2.bf16.msra.mxu0 0
        %641 = vmatprep.subr.bf16.mxu0 0
        %642 = vmatpush2.bf16.msra.mxu0 0
        %643 = vmatprep.subr.bf16.mxu0 0
        %644 = vmatpush2.bf16.msra.mxu0 0
        %645 = vmatprep.subr.bf16.mxu0 0
        %646 = vmatpush2.bf16.msra.mxu0 0
        %647 = vmatprep.mubr.bf16.mxu0 0
        %648 = vmatmul.mubr.bf16.gmra.mxu0 %v606
        %v649 = vpop.f32.mrf.mxu0
        %v650 = vadd.f32 0.0, %v649
        %v651 = vpop.f32.mrf.mxu0
        %v652 = vpop.f32.mrf.mxu0
        %v653 = vadd.f32 0.0, %v652
        %v654 = vpop.f32.mrf.mxu0
        %655 = vmatprep.mubr.bf16.mxu0 0
        %656 = vmatmul.mubr.bf16.gmra.mxu0 %v609
        %v657 = vpop.f32.mrf.mxu0
        %v658 = vadd.f32 0.0, %v657
        %v659 = vpop.f32.mrf.mxu0
        %v660 = vpop.f32.mrf.mxu0
        %v661 = vadd.f32 0.0, %v660
        %v662 = vpop.f32.mrf.mxu0
        %663 = vdwg.mxu0
        %v668 = vunpack.c.l.b16 %v584
        %v669 = vunpack.c.l.b16 %v585
        %v670 = vunpack.c.l.b16 %v586
        %v671 = vunpack.c.l.b16 %v587
        %v672 = vpack.c.b16 %v669, %v668
        %v673 = vpack.c.b16 %v671, %v670
        %vm674 = vcmask 48128
        %v676 = vsel %vm674, %v672, 0
        %v679 = vsel %vm674, %v673, 0
        %vm681 = vcmask 1042432
        %v683 = vsel %vm681, %v588, 0
        %685 = vmatprep.subr.bf16.mxu0 0
        %686 = vmatpush1.bf16.msra.mxu0 0
        %687 = vmatprep.subr.bf16.mxu0 0
        %688 = vmatpush1.bf16.msra.mxu0 0
        %689 = vmatprep.subr.bf16.mxu0 0
        %690 = vmatpush1.bf16.msra.mxu0 0
        %691 = vmatprep.subr.bf16.mxu0 0
        %692 = vmatpush1.bf16.msra.mxu0 0
        %693 = vmatprep.subr.bf16.mxu0 0
        %694 = vmatpush1.bf16.msra.mxu0 0
        %695 = vmatprep.subr.bf16.mxu0 0
        %696 = vmatpush1.bf16.msra.mxu0 0
        %697 = vmatprep.subr.bf16.mxu0 0
        %698 = vmatpush1.bf16.msra.mxu0 0
        %699 = vmatprep.subr.bf16.mxu0 0
        %700 = vmatpush1.bf16.msra.mxu0 %v683
        %701 = vmatprep.subr.bf16.mxu0 0
        %702 = vmatpush2.bf16.msra.mxu0 0
        %703 = vmatprep.subr.bf16.mxu0 0
        %704 = vmatpush2.bf16.msra.mxu0 0
        %705 = vmatprep.subr.bf16.mxu0 0
        %706 = vmatpush2.bf16.msra.mxu0 0
        %707 = vmatprep.subr.bf16.mxu0 0
        %708 = vmatpush2.bf16.msra.mxu0 0
        %709 = vmatprep.subr.bf16.mxu0 0
        %710 = vmatpush2.bf16.msra.mxu0 0
        %711 = vmatprep.subr.bf16.mxu0 0
        %712 = vmatpush2.bf16.msra.mxu0 0
        %713 = vmatprep.subr.bf16.mxu0 0
        %714 = vmatpush2.bf16.msra.mxu0 0
        %715 = vmatprep.subr.bf16.mxu0 0
        %716 = vmatpush2.bf16.msra.mxu0 0
        %717 = vmatprep.mubr.bf16.mxu0 0
        %718 = vmatmul.mubr.bf16.gmra.mxu0 %v676
        %v719 = vpop.f32.mrf.mxu0
        %v720 = vadd.f32 %v650, %v719
        %v721 = vpop.f32.mrf.mxu0
        %v722 = vpop.f32.mrf.mxu0
        %v723 = vadd.f32 %v653, %v722
        %v724 = vpop.f32.mrf.mxu0
        %725 = vmatprep.mubr.bf16.mxu0 0
        %726 = vmatmul.mubr.bf16.gmra.mxu0 %v679
        %v727 = vpop.f32.mrf.mxu0
        %v728 = vadd.f32 %v658, %v727
        %v729 = vpop.f32.mrf.mxu0
        %v730 = vpop.f32.mrf.mxu0
        %v731 = vadd.f32 %v661, %v730
        %v732 = vpop.f32.mrf.mxu0
        %733 = vdwg.mxu0
        %735 = vset.pattern.permute.xlu0 0
        %736 = vperm.xlu0 %735, %v578
        %v737 = vpop.permute.xlu0 %736
        %740 = vset.pattern.permute.xlu0 0
        %741 = vperm.xlu0 %740, %v579
        %v742 = vpop.permute.xlu0 %741
        %745 = vset.pattern.permute.xlu0 0
        %746 = vperm.xlu0 %745, %v580
        %v747 = vpop.permute.xlu0 %746
        %750 = vset.pattern.permute.xlu0 0
        %751 = vperm.xlu0 %750, %v581
        %v752 = vpop.permute.xlu0 %751
        %v754 = vadd.f32 %v720, %v737
        %v755 = vadd.f32 %v723, %v742
        %v756 = vadd.f32 %v728, %v747
        %v757 = vadd.f32 %v731, %v752
        %v758 = vmax.f32 %v754, 0.0
        %v759 = vmax.f32 %v755, 0.0
        %v760 = vmax.f32 %v756, 0.0
        %v761 = vmax.f32 %v757, 0.0
        %v762 = vld [vmem:[%s6] sm:$0xf]
        %v763 = vld [vmem:[%s6 + $0x4] sm:$0xf]
        %v764 = vpack.c.bf16 %v759, %v758
        %v765 = vpack.c.bf16 %v761, %v760
        %767 = vset.pattern.permute.xlu0 0
        %768 = vperm.xlu0 %767, %v582
        %v769 = vpop.permute.xlu0 %768
        %772 = vset.pattern.permute.xlu0 0
        %773 = vperm.xlu0 %772, %v583
        %v774 = vpop.permute.xlu0 %773
        %v778 = vunpack.c.l.b16 %v762
        %v779 = vunpack.c.l.b16 %v763
        %v780 = vpack.c.b16 %v779, %v778
        %vm781 = vcmask 261120
        %v783 = vsel %vm781, %v780, 0
        %785 = vmatprep.subr.bf16.mxu0 0
        %786 = vmatpush1.bf16.msra.mxu0 0
        %787 = vmatprep.subr.bf16.mxu0 0
        %788 = vmatpush1.bf16.msra.mxu0 0
        %789 = vmatprep.subr.bf16.mxu0 0
        %790 = vmatpush1.bf16.msra.mxu0 0
        %791 = vmatprep.subr.bf16.mxu0 0
        %792 = vmatpush1.bf16.msra.mxu0 0
        %793 = vmatprep.subr.bf16.mxu0 0
        %794 = vmatpush1.bf16.msra.mxu0 0
        %795 = vmatprep.subr.bf16.mxu0 0
        %796 = vmatpush1.bf16.msra.mxu0 0
        %797 = vmatprep.subr.bf16.mxu0 0
        %798 = vmatpush1.bf16.msra.mxu0 %v765
        %799 = vmatprep.subr.bf16.mxu0 0
        %800 = vmatpush1.bf16.msra.mxu0 %v764
        %801 = vmatprep.subr.bf16.mxu0 0
        %802 = vmatpush2.bf16.msra.mxu0 0
        %803 = vmatprep.subr.bf16.mxu0 0
        %804 = vmatpush2.bf16.msra.mxu0 0
        %805 = vmatprep.subr.bf16.mxu0 0
        %806 = vmatpush2.bf16.msra.mxu0 0
        %807 = vmatprep.subr.bf16.mxu0 0
        %808 = vmatpush2.bf16.msra.mxu0 0
        %809 = vmatprep.subr.bf16.mxu0 0
        %810 = vmatpush2.bf16.msra.mxu0 0
        %811 = vmatprep.subr.bf16.mxu0 0
        %812 = vmatpush2.bf16.msra.mxu0 0
        %813 = vmatprep.subr.bf16.mxu0 0
        %814 = vmatpush2.bf16.msra.mxu0 0
        %815 = vmatprep.subr.bf16.mxu0 0
        %816 = vmatpush2.bf16.msra.mxu0 0
        %817 = vmatprep.mubr.bf16.mxu0 0
        %818 = vmatmul.mubr.bf16.gmra.mxu0 %v783
        %v819 = vpop.f32.mrf.mxu0
        %v820 = vadd.f32 %v769, %v819
        %v821 = vpop.f32.mrf.mxu0
        %v822 = vpop.f32.mrf.mxu0
        %v823 = vadd.f32 %v774, %v822
        %v824 = vpop.f32.mrf.mxu0
        %825 = vdwg.mxu0
        %v826 = vmax.f32 %v820, 0.0
        %v827 = vmax.f32 %v823, 0.0
        %828 = vst.msk [vmem:[%s365] sm:$0xff] %vm426, %v826
        %829 = vst.msk [vmem:[%s365 + $0x8] sm:$0xff] %vm426, %v827
        %s830 = sand.u32 %s236, 1
        %s831 = scalar_lea.sflag [#allocation3], %s830
        %s832 = sand.u32 %s236, 1
        %s833 = smul.addr %s832, 16
        %s834 = scalar_lea.vmem [#allocation2], %s833
        // Predicated region
        $region53: #{tpu_custom_call.1} parent=51 // pred_check
          %p835 = pneg %p246
        $region54: #{tpu_custom_call.1} parent=51 // pred_check_branch
          %837 = sbr.rel (%p835) target = $region56
        $region55: #{tpu_custom_call.1} parent=51 // pred_region
          %s839 = ssub.s32 256, 256
          %840 = vsyncadd %s831, %s839
          %s841 = smul.addr %s26, 2
          %s842 = sadd.s32 %s27, %s841
          %s843 = smul.addr %s842, 128
          %s844 = scalar_lea.hbm %s8, %s843
          %s845 = sshll.u32 %s834, 4
          %s846 = int_to_ptr.vmem [resolvable:$true] %s845
          %851 = dma.vmem_to_hbm [thread:$0]  %s846, 256, %s844, %s831, 128, 128, 8
        $region56: #{tpu_custom_call.1} parent=51 // pred_fallthru
          _
      $region52: #{tpu_custom_call.1} parent=5 // pred_fallthru
        _
      %p852 = scmp.le.s32.totalorder 2, %s17
      // Predicated region
      $region57: #{tpu_custom_call.1} parent=5 // pred_check
        %p853 = pneg %p852
      $region58: #{tpu_custom_call.1} parent=5 // pred_check_branch
        %855 = sbr.rel (%p853) target = $region60
      $region59: #{tpu_custom_call.1} parent=5 // pred_region
        %s856 = ssub.s32 %s17, 2
        // Predicated region
        $region61: #{tpu_custom_call.1} parent=59 // pred_check
          %p857 = pneg %p252
        $region62: #{tpu_custom_call.1} parent=59 // pred_check_branch
          %859 = sbr.rel (%p857) target = $region64
        $region63: #{tpu_custom_call.1} parent=59 // pred_region
          %s860 = sand.u32 %s237, 1
          %s861 = scalar_lea.sflag [#allocation3], %s860
          %s862 = sand.u32 %s237, 1
          %s863 = smul.addr %s862, 16
          %s864 = scalar_lea.vmem [#allocation2], %s863
          %865 = dma.done %s861, 256
        $region64: #{tpu_custom_call.1} parent=59 // pred_fallthru
          _
      $region60: #{tpu_custom_call.1} parent=5 // pred_fallthru
        _
    $region6: #{tpu_custom_call.1} parent=1 // loop_footer
      %s21 = sadd.s32 1, %s17
    $region7: #{tpu_custom_call.1} parent=1 // loop_footer_branch
      %16 = sbr.rel target = $region3
    $region8: #{tpu_custom_call.1} parent=1 // loop_exit
      _
    %866 = vsyncpa [#allocation3], 1
    %s867 = scalar_lea.sflag [#allocation3], 1
    %868 = vsyncpa %s867, 1

</llo_original>
